<compile_context>
chip_gen: v7x
topology: tpu7x:2x2x1
jax: 0.10.0
libtpu: 0.0.40
codegen_flags: <defaults>
</compile_context>

<pallas_src>
import jax
import jax.numpy as jnp
from jax.experimental import pallas as pl
from jax.experimental.pallas import tpu as pltpu

# Chunk plan mirroring Model.forward:
#   torch.chunk(x, 2, dim=0), torch.chunk(y, 3, dim=1), torch.chunk(z, 5, dim=1)
_CHUNK_PLAN = ((2, 0), (3, 1), (5, 1))
_NUM_OUTS = sum(c for c, _ in _CHUNK_PLAN)  # 10


def _fused_chunk_kernel(x_ref, y_ref, z_ref, *rest):
    """Start all per-chunk HBM->HBM DMAs, then wait on all of them."""
    out_refs = rest[:_NUM_OUTS]
    sem = rest[_NUM_OUTS]
    in_refs = (x_ref, y_ref, z_ref)

    copies = []
    oi = 0
    for in_ref, (chunks, dim) in zip(in_refs, _CHUNK_PLAN):
        ndim = len(in_ref.shape)
        size = in_ref.shape[dim] // chunks
        for c in range(chunks):
            idx = tuple(
                slice(c * size, (c + 1) * size) if d == dim else slice(None)
                for d in range(ndim))
            cp = pltpu.make_async_copy(in_ref.at[idx], out_refs[oi], sem.at[oi])
            cp.start()
            copies.append(cp)
            oi += 1

    # All 10 transfers are now in flight concurrently; drain them.
    for cp in copies:
        cp.wait()


@jax.jit
def model_forward(x, y, z):
    """Reproduces Model.forward(x, y, z) with ONE fused pallas_call.

    NOTE: for a standalone op this small, tuple(jnp.split(...)) would be at
    least as fast (zero-copy / fusable); the Pallas path is kept because this
    is a Pallas exercise.
    """
    ins = (x, y, z)
    out_shapes = []
    total_bytes = 0
    for arr, (chunks, dim) in zip(ins, _CHUNK_PLAN):
        # TODO(synk): torch.chunk also supports non-divisible sizes (smaller
        # last chunk / fewer chunks); this implementation assumes divisibility.
        assert arr.shape[dim] % chunks == 0
        n = arr.shape[dim] // chunks
        cshape = tuple(n if d == dim else s for d, s in enumerate(arr.shape))
        out_shapes.extend([jax.ShapeDtypeStruct(cshape, arr.dtype)] * chunks)
        total_bytes += arr.size * arr.dtype.itemsize

    outs = pl.pallas_call(
        _fused_chunk_kernel,
        out_shape=tuple(out_shapes),
        # No grid, no VMEM staging: inputs/outputs stay in HBM and the kernel
        # body issues direct HBM->HBM DMAs.
        in_specs=[pl.BlockSpec(memory_space=pl.ANY) for _ in ins],
        out_specs=tuple(pl.BlockSpec(memory_space=pl.ANY) for _ in out_shapes),
        scratch_shapes=[pltpu.SemaphoreType.DMA((_NUM_OUTS,))],
        cost_estimate=pl.CostEstimate(
            flops=0, transcendentals=0, bytes_accessed=2 * total_bytes),
    )(x, y, z)
    return tuple(outs)


if __name__ == "__main__":
    key = jax.random.PRNGKey(0)
    kx, ky, kz = jax.random.split(key, 3)

    x = jax.random.normal(kx, (16, 128), dtype=jnp.float32)
    y = jax.random.normal(ky, (2, 24, 128), dtype=jnp.float32)
    z = jax.random.normal(kz, (2, 10, 8, 128), dtype=jnp.float32)

    outs = model_forward(x, y, z)
    outs = jax.block_until_ready(outs)

    # Reference check against jnp.split (same semantics as torch.chunk for
    # evenly divisible sizes).
    refs = (tuple(jnp.split(x, 2, axis=0))
            + tuple(jnp.split(y, 3, axis=1))
            + tuple(jnp.split(z, 5, axis=1)))
    assert len(outs) == 10
    for got, ref in zip(outs, refs):
        assert got.shape == ref.shape and got.dtype == ref.dtype
        assert bool(jnp.array_equal(got, ref))

    print("KERNEL_OK")
</pallas_src>

<mosaic_0001>
module attributes {stable_mosaic.version = 11 : i64} {
  func.func @_fused_chunk_kernel(%arg0: memref<16x128xf32, #tpu.memory_space<any>>, %arg1: memref<2x24x128xf32, #tpu.memory_space<any>>, %arg2: memref<2x10x8x128xf32, #tpu.memory_space<any>>, %arg3: memref<8x128xf32, #tpu.memory_space<any>>, %arg4: memref<8x128xf32, #tpu.memory_space<any>>, %arg5: memref<2x8x128xf32, #tpu.memory_space<any>>, %arg6: memref<2x8x128xf32, #tpu.memory_space<any>>, %arg7: memref<2x8x128xf32, #tpu.memory_space<any>>, %arg8: memref<2x2x8x128xf32, #tpu.memory_space<any>>, %arg9: memref<2x2x8x128xf32, #tpu.memory_space<any>>, %arg10: memref<2x2x8x128xf32, #tpu.memory_space<any>>, %arg11: memref<2x2x8x128xf32, #tpu.memory_space<any>>, %arg12: memref<2x2x8x128xf32, #tpu.memory_space<any>>, %arg13: memref<10x!tpu.dma_semaphore, #tpu.memory_space<semaphore_mem>>) attributes {dimension_semantics = [], scalar_prefetch = 0 : i64, scratch_operands = 1 : i64, tpu.core_type = #tpu.core_type<tc>} {
    %c0_i32 = arith.constant 0 : i32
    %c0_i32_0 = arith.constant 0 : i32
    %c0_i32_1 = arith.constant 0 : i32
    %0 = tpu.memref_slice %arg0[%c0_i32_0, %c0_i32_1] : memref<16x128xf32, #tpu.memory_space<any>> -> memref<8x128xf32, #tpu.memory_space<any>>
    %1 = tpu.memref_slice %arg13[%c0_i32] : memref<10x!tpu.dma_semaphore, #tpu.memory_space<semaphore_mem>> -> memref<1x!tpu.dma_semaphore, #tpu.memory_space<semaphore_mem>>
    %2 = tpu.memref_squeeze %1 : memref<1x!tpu.dma_semaphore, #tpu.memory_space<semaphore_mem>> -> memref<!tpu.dma_semaphore, #tpu.memory_space<semaphore_mem>>
    tpu.enqueue_dma source(%0 : memref<8x128xf32, #tpu.memory_space<any>>) target(%arg3 : memref<8x128xf32, #tpu.memory_space<any>>) target_semaphore(%2 : memref<!tpu.dma_semaphore, #tpu.memory_space<semaphore_mem>>)
    %c1_i32 = arith.constant 1 : i32
    %c8_i32 = arith.constant 8 : i32
    %c0_i32_2 = arith.constant 0 : i32
    %3 = tpu.memref_slice %arg0[%c8_i32, %c0_i32_2] : memref<16x128xf32, #tpu.memory_space<any>> -> memref<8x128xf32, #tpu.memory_space<any>>
    %4 = tpu.memref_slice %arg13[%c1_i32] : memref<10x!tpu.dma_semaphore, #tpu.memory_space<semaphore_mem>> -> memref<1x!tpu.dma_semaphore, #tpu.memory_space<semaphore_mem>>
    %5 = tpu.memref_squeeze %4 : memref<1x!tpu.dma_semaphore, #tpu.memory_space<semaphore_mem>> -> memref<!tpu.dma_semaphore, #tpu.memory_space<semaphore_mem>>
    tpu.enqueue_dma source(%3 : memref<8x128xf32, #tpu.memory_space<any>>) target(%arg4 : memref<8x128xf32, #tpu.memory_space<any>>) target_semaphore(%5 : memref<!tpu.dma_semaphore, #tpu.memory_space<semaphore_mem>>)
    %c2_i32 = arith.constant 2 : i32
    %c0_i32_3 = arith.constant 0 : i32
    %c0_i32_4 = arith.constant 0 : i32
    %c0_i32_5 = arith.constant 0 : i32
    %6 = tpu.memref_slice %arg1[%c0_i32_3, %c0_i32_4, %c0_i32_5] : memref<2x24x128xf32, #tpu.memory_space<any>> -> memref<2x8x128xf32, #tpu.memory_space<any>>
    %7 = tpu.memref_slice %arg13[%c2_i32] : memref<10x!tpu.dma_semaphore, #tpu.memory_space<semaphore_mem>> -> memref<1x!tpu.dma_semaphore, #tpu.memory_space<semaphore_mem>>
    %8 = tpu.memref_squeeze %7 : memref<1x!tpu.dma_semaphore, #tpu.memory_space<semaphore_mem>> -> memref<!tpu.dma_semaphore, #tpu.memory_space<semaphore_mem>>
    tpu.enqueue_dma source(%6 : memref<2x8x128xf32, #tpu.memory_space<any>>) target(%arg5 : memref<2x8x128xf32, #tpu.memory_space<any>>) target_semaphore(%8 : memref<!tpu.dma_semaphore, #tpu.memory_space<semaphore_mem>>)
    %c3_i32 = arith.constant 3 : i32
    %c0_i32_6 = arith.constant 0 : i32
    %c8_i32_7 = arith.constant 8 : i32
    %c0_i32_8 = arith.constant 0 : i32
    %9 = tpu.memref_slice %arg1[%c0_i32_6, %c8_i32_7, %c0_i32_8] : memref<2x24x128xf32, #tpu.memory_space<any>> -> memref<2x8x128xf32, #tpu.memory_space<any>>
    %10 = tpu.memref_slice %arg13[%c3_i32] : memref<10x!tpu.dma_semaphore, #tpu.memory_space<semaphore_mem>> -> memref<1x!tpu.dma_semaphore, #tpu.memory_space<semaphore_mem>>
    %11 = tpu.memref_squeeze %10 : memref<1x!tpu.dma_semaphore, #tpu.memory_space<semaphore_mem>> -> memref<!tpu.dma_semaphore, #tpu.memory_space<semaphore_mem>>
    tpu.enqueue_dma source(%9 : memref<2x8x128xf32, #tpu.memory_space<any>>) target(%arg6 : memref<2x8x128xf32, #tpu.memory_space<any>>) target_semaphore(%11 : memref<!tpu.dma_semaphore, #tpu.memory_space<semaphore_mem>>)
    %c4_i32 = arith.constant 4 : i32
    %c0_i32_9 = arith.constant 0 : i32
    %c16_i32 = arith.constant 16 : i32
    %c0_i32_10 = arith.constant 0 : i32
    %12 = tpu.memref_slice %arg1[%c0_i32_9, %c16_i32, %c0_i32_10] : memref<2x24x128xf32, #tpu.memory_space<any>> -> memref<2x8x128xf32, #tpu.memory_space<any>>
    %13 = tpu.memref_slice %arg13[%c4_i32] : memref<10x!tpu.dma_semaphore, #tpu.memory_space<semaphore_mem>> -> memref<1x!tpu.dma_semaphore, #tpu.memory_space<semaphore_mem>>
    %14 = tpu.memref_squeeze %13 : memref<1x!tpu.dma_semaphore, #tpu.memory_space<semaphore_mem>> -> memref<!tpu.dma_semaphore, #tpu.memory_space<semaphore_mem>>
    tpu.enqueue_dma source(%12 : memref<2x8x128xf32, #tpu.memory_space<any>>) target(%arg7 : memref<2x8x128xf32, #tpu.memory_space<any>>) target_semaphore(%14 : memref<!tpu.dma_semaphore, #tpu.memory_space<semaphore_mem>>)
    %c5_i32 = arith.constant 5 : i32
    %c0_i32_11 = arith.constant 0 : i32
    %c0_i32_12 = arith.constant 0 : i32
    %c0_i32_13 = arith.constant 0 : i32
    %c0_i32_14 = arith.constant 0 : i32
    %15 = tpu.memref_slice %arg2[%c0_i32_11, %c0_i32_12, %c0_i32_13, %c0_i32_14] : memref<2x10x8x128xf32, #tpu.memory_space<any>> -> memref<2x2x8x128xf32, #tpu.memory_space<any>>
    %16 = tpu.memref_slice %arg13[%c5_i32] : memref<10x!tpu.dma_semaphore, #tpu.memory_space<semaphore_mem>> -> memref<1x!tpu.dma_semaphore, #tpu.memory_space<semaphore_mem>>
    %17 = tpu.memref_squeeze %16 : memref<1x!tpu.dma_semaphore, #tpu.memory_space<semaphore_mem>> -> memref<!tpu.dma_semaphore, #tpu.memory_space<semaphore_mem>>
    tpu.enqueue_dma source(%15 : memref<2x2x8x128xf32, #tpu.memory_space<any>>) target(%arg8 : memref<2x2x8x128xf32, #tpu.memory_space<any>>) target_semaphore(%17 : memref<!tpu.dma_semaphore, #tpu.memory_space<semaphore_mem>>)
    %c6_i32 = arith.constant 6 : i32
    %c0_i32_15 = arith.constant 0 : i32
    %c2_i32_16 = arith.constant 2 : i32
    %c0_i32_17 = arith.constant 0 : i32
    %c0_i32_18 = arith.constant 0 : i32
    %18 = tpu.memref_slice %arg2[%c0_i32_15, %c2_i32_16, %c0_i32_17, %c0_i32_18] : memref<2x10x8x128xf32, #tpu.memory_space<any>> -> memref<2x2x8x128xf32, #tpu.memory_space<any>>
    %19 = tpu.memref_slice %arg13[%c6_i32] : memref<10x!tpu.dma_semaphore, #tpu.memory_space<semaphore_mem>> -> memref<1x!tpu.dma_semaphore, #tpu.memory_space<semaphore_mem>>
    %20 = tpu.memref_squeeze %19 : memref<1x!tpu.dma_semaphore, #tpu.memory_space<semaphore_mem>> -> memref<!tpu.dma_semaphore, #tpu.memory_space<semaphore_mem>>
    tpu.enqueue_dma source(%18 : memref<2x2x8x128xf32, #tpu.memory_space<any>>) target(%arg9 : memref<2x2x8x128xf32, #tpu.memory_space<any>>) target_semaphore(%20 : memref<!tpu.dma_semaphore, #tpu.memory_space<semaphore_mem>>)
    %c7_i32 = arith.constant 7 : i32
    %c0_i32_19 = arith.constant 0 : i32
    %c4_i32_20 = arith.constant 4 : i32
    %c0_i32_21 = arith.constant 0 : i32
    %c0_i32_22 = arith.constant 0 : i32
    %21 = tpu.memref_slice %arg2[%c0_i32_19, %c4_i32_20, %c0_i32_21, %c0_i32_22] : memref<2x10x8x128xf32, #tpu.memory_space<any>> -> memref<2x2x8x128xf32, #tpu.memory_space<any>>
    %22 = tpu.memref_slice %arg13[%c7_i32] : memref<10x!tpu.dma_semaphore, #tpu.memory_space<semaphore_mem>> -> memref<1x!tpu.dma_semaphore, #tpu.memory_space<semaphore_mem>>
    %23 = tpu.memref_squeeze %22 : memref<1x!tpu.dma_semaphore, #tpu.memory_space<semaphore_mem>> -> memref<!tpu.dma_semaphore, #tpu.memory_space<semaphore_mem>>
    tpu.enqueue_dma source(%21 : memref<2x2x8x128xf32, #tpu.memory_space<any>>) target(%arg10 : memref<2x2x8x128xf32, #tpu.memory_space<any>>) target_semaphore(%23 : memref<!tpu.dma_semaphore, #tpu.memory_space<semaphore_mem>>)
    %c8_i32_23 = arith.constant 8 : i32
    %c0_i32_24 = arith.constant 0 : i32
    %c6_i32_25 = arith.constant 6 : i32
    %c0_i32_26 = arith.constant 0 : i32
    %c0_i32_27 = arith.constant 0 : i32
    %24 = tpu.memref_slice %arg2[%c0_i32_24, %c6_i32_25, %c0_i32_26, %c0_i32_27] : memref<2x10x8x128xf32, #tpu.memory_space<any>> -> memref<2x2x8x128xf32, #tpu.memory_space<any>>
    %25 = tpu.memref_slice %arg13[%c8_i32_23] : memref<10x!tpu.dma_semaphore, #tpu.memory_space<semaphore_mem>> -> memref<1x!tpu.dma_semaphore, #tpu.memory_space<semaphore_mem>>
    %26 = tpu.memref_squeeze %25 : memref<1x!tpu.dma_semaphore, #tpu.memory_space<semaphore_mem>> -> memref<!tpu.dma_semaphore, #tpu.memory_space<semaphore_mem>>
    tpu.enqueue_dma source(%24 : memref<2x2x8x128xf32, #tpu.memory_space<any>>) target(%arg11 : memref<2x2x8x128xf32, #tpu.memory_space<any>>) target_semaphore(%26 : memref<!tpu.dma_semaphore, #tpu.memory_space<semaphore_mem>>)
    %c9_i32 = arith.constant 9 : i32
    %c0_i32_28 = arith.constant 0 : i32
    %c8_i32_29 = arith.constant 8 : i32
    %c0_i32_30 = arith.constant 0 : i32
    %c0_i32_31 = arith.constant 0 : i32
    %27 = tpu.memref_slice %arg2[%c0_i32_28, %c8_i32_29, %c0_i32_30, %c0_i32_31] : memref<2x10x8x128xf32, #tpu.memory_space<any>> -> memref<2x2x8x128xf32, #tpu.memory_space<any>>
    %28 = tpu.memref_slice %arg13[%c9_i32] : memref<10x!tpu.dma_semaphore, #tpu.memory_space<semaphore_mem>> -> memref<1x!tpu.dma_semaphore, #tpu.memory_space<semaphore_mem>>
    %29 = tpu.memref_squeeze %28 : memref<1x!tpu.dma_semaphore, #tpu.memory_space<semaphore_mem>> -> memref<!tpu.dma_semaphore, #tpu.memory_space<semaphore_mem>>
    tpu.enqueue_dma source(%27 : memref<2x2x8x128xf32, #tpu.memory_space<any>>) target(%arg12 : memref<2x2x8x128xf32, #tpu.memory_space<any>>) target_semaphore(%29 : memref<!tpu.dma_semaphore, #tpu.memory_space<semaphore_mem>>)
    %c0_i32_32 = arith.constant 0 : i32
    %c0_i32_33 = arith.constant 0 : i32
    %c0_i32_34 = arith.constant 0 : i32
    %30 = tpu.memref_slice %arg0[%c0_i32_33, %c0_i32_34] : memref<16x128xf32, #tpu.memory_space<any>> -> memref<8x128xf32, #tpu.memory_space<any>>
    %31 = tpu.memref_slice %arg13[%c0_i32_32] : memref<10x!tpu.dma_semaphore, #tpu.memory_space<semaphore_mem>> -> memref<1x!tpu.dma_semaphore, #tpu.memory_space<semaphore_mem>>
    %32 = tpu.memref_squeeze %31 : memref<1x!tpu.dma_semaphore, #tpu.memory_space<semaphore_mem>> -> memref<!tpu.dma_semaphore, #tpu.memory_space<semaphore_mem>>
    tpu.wait_dma2 semaphore(%32 : memref<!tpu.dma_semaphore, #tpu.memory_space<semaphore_mem>>) src(%30 : memref<8x128xf32, #tpu.memory_space<any>>) dst(%arg3 : memref<8x128xf32, #tpu.memory_space<any>>)
    %c1_i32_35 = arith.constant 1 : i32
    %c8_i32_36 = arith.constant 8 : i32
    %c0_i32_37 = arith.constant 0 : i32
    %33 = tpu.memref_slice %arg0[%c8_i32_36, %c0_i32_37] : memref<16x128xf32, #tpu.memory_space<any>> -> memref<8x128xf32, #tpu.memory_space<any>>
    %34 = tpu.memref_slice %arg13[%c1_i32_35] : memref<10x!tpu.dma_semaphore, #tpu.memory_space<semaphore_mem>> -> memref<1x!tpu.dma_semaphore, #tpu.memory_space<semaphore_mem>>
    %35 = tpu.memref_squeeze %34 : memref<1x!tpu.dma_semaphore, #tpu.memory_space<semaphore_mem>> -> memref<!tpu.dma_semaphore, #tpu.memory_space<semaphore_mem>>
    tpu.wait_dma2 semaphore(%35 : memref<!tpu.dma_semaphore, #tpu.memory_space<semaphore_mem>>) src(%33 : memref<8x128xf32, #tpu.memory_space<any>>) dst(%arg4 : memref<8x128xf32, #tpu.memory_space<any>>)
    %c2_i32_38 = arith.constant 2 : i32
    %c0_i32_39 = arith.constant 0 : i32
    %c0_i32_40 = arith.constant 0 : i32
    %c0_i32_41 = arith.constant 0 : i32
    %36 = tpu.memref_slice %arg1[%c0_i32_39, %c0_i32_40, %c0_i32_41] : memref<2x24x128xf32, #tpu.memory_space<any>> -> memref<2x8x128xf32, #tpu.memory_space<any>>
    %37 = tpu.memref_slice %arg13[%c2_i32_38] : memref<10x!tpu.dma_semaphore, #tpu.memory_space<semaphore_mem>> -> memref<1x!tpu.dma_semaphore, #tpu.memory_space<semaphore_mem>>
    %38 = tpu.memref_squeeze %37 : memref<1x!tpu.dma_semaphore, #tpu.memory_space<semaphore_mem>> -> memref<!tpu.dma_semaphore, #tpu.memory_space<semaphore_mem>>
    tpu.wait_dma2 semaphore(%38 : memref<!tpu.dma_semaphore, #tpu.memory_space<semaphore_mem>>) src(%36 : memref<2x8x128xf32, #tpu.memory_space<any>>) dst(%arg5 : memref<2x8x128xf32, #tpu.memory_space<any>>)
    %c3_i32_42 = arith.constant 3 : i32
    %c0_i32_43 = arith.constant 0 : i32
    %c8_i32_44 = arith.constant 8 : i32
    %c0_i32_45 = arith.constant 0 : i32
    %39 = tpu.memref_slice %arg1[%c0_i32_43, %c8_i32_44, %c0_i32_45] : memref<2x24x128xf32, #tpu.memory_space<any>> -> memref<2x8x128xf32, #tpu.memory_space<any>>
    %40 = tpu.memref_slice %arg13[%c3_i32_42] : memref<10x!tpu.dma_semaphore, #tpu.memory_space<semaphore_mem>> -> memref<1x!tpu.dma_semaphore, #tpu.memory_space<semaphore_mem>>
    %41 = tpu.memref_squeeze %40 : memref<1x!tpu.dma_semaphore, #tpu.memory_space<semaphore_mem>> -> memref<!tpu.dma_semaphore, #tpu.memory_space<semaphore_mem>>
    tpu.wait_dma2 semaphore(%41 : memref<!tpu.dma_semaphore, #tpu.memory_space<semaphore_mem>>) src(%39 : memref<2x8x128xf32, #tpu.memory_space<any>>) dst(%arg6 : memref<2x8x128xf32, #tpu.memory_space<any>>)
    %c4_i32_46 = arith.constant 4 : i32
    %c0_i32_47 = arith.constant 0 : i32
    %c16_i32_48 = arith.constant 16 : i32
    %c0_i32_49 = arith.constant 0 : i32
    %42 = tpu.memref_slice %arg1[%c0_i32_47, %c16_i32_48, %c0_i32_49] : memref<2x24x128xf32, #tpu.memory_space<any>> -> memref<2x8x128xf32, #tpu.memory_space<any>>
    %43 = tpu.memref_slice %arg13[%c4_i32_46] : memref<10x!tpu.dma_semaphore, #tpu.memory_space<semaphore_mem>> -> memref<1x!tpu.dma_semaphore, #tpu.memory_space<semaphore_mem>>
    %44 = tpu.memref_squeeze %43 : memref<1x!tpu.dma_semaphore, #tpu.memory_space<semaphore_mem>> -> memref<!tpu.dma_semaphore, #tpu.memory_space<semaphore_mem>>
    tpu.wait_dma2 semaphore(%44 : memref<!tpu.dma_semaphore, #tpu.memory_space<semaphore_mem>>) src(%42 : memref<2x8x128xf32, #tpu.memory_space<any>>) dst(%arg7 : memref<2x8x128xf32, #tpu.memory_space<any>>)
    %c5_i32_50 = arith.constant 5 : i32
    %c0_i32_51 = arith.constant 0 : i32
    %c0_i32_52 = arith.constant 0 : i32
    %c0_i32_53 = arith.constant 0 : i32
    %c0_i32_54 = arith.constant 0 : i32
    %45 = tpu.memref_slice %arg2[%c0_i32_51, %c0_i32_52, %c0_i32_53, %c0_i32_54] : memref<2x10x8x128xf32, #tpu.memory_space<any>> -> memref<2x2x8x128xf32, #tpu.memory_space<any>>
    %46 = tpu.memref_slice %arg13[%c5_i32_50] : memref<10x!tpu.dma_semaphore, #tpu.memory_space<semaphore_mem>> -> memref<1x!tpu.dma_semaphore, #tpu.memory_space<semaphore_mem>>
    %47 = tpu.memref_squeeze %46 : memref<1x!tpu.dma_semaphore, #tpu.memory_space<semaphore_mem>> -> memref<!tpu.dma_semaphore, #tpu.memory_space<semaphore_mem>>
    tpu.wait_dma2 semaphore(%47 : memref<!tpu.dma_semaphore, #tpu.memory_space<semaphore_mem>>) src(%45 : memref<2x2x8x128xf32, #tpu.memory_space<any>>) dst(%arg8 : memref<2x2x8x128xf32, #tpu.memory_space<any>>)
    %c6_i32_55 = arith.constant 6 : i32
    %c0_i32_56 = arith.constant 0 : i32
    %c2_i32_57 = arith.constant 2 : i32
    %c0_i32_58 = arith.constant 0 : i32
    %c0_i32_59 = arith.constant 0 : i32
    %48 = tpu.memref_slice %arg2[%c0_i32_56, %c2_i32_57, %c0_i32_58, %c0_i32_59] : memref<2x10x8x128xf32, #tpu.memory_space<any>> -> memref<2x2x8x128xf32, #tpu.memory_space<any>>
    %49 = tpu.memref_slice %arg13[%c6_i32_55] : memref<10x!tpu.dma_semaphore, #tpu.memory_space<semaphore_mem>> -> memref<1x!tpu.dma_semaphore, #tpu.memory_space<semaphore_mem>>
    %50 = tpu.memref_squeeze %49 : memref<1x!tpu.dma_semaphore, #tpu.memory_space<semaphore_mem>> -> memref<!tpu.dma_semaphore, #tpu.memory_space<semaphore_mem>>
    tpu.wait_dma2 semaphore(%50 : memref<!tpu.dma_semaphore, #tpu.memory_space<semaphore_mem>>) src(%48 : memref<2x2x8x128xf32, #tpu.memory_space<any>>) dst(%arg9 : memref<2x2x8x128xf32, #tpu.memory_space<any>>)
    %c7_i32_60 = arith.constant 7 : i32
    %c0_i32_61 = arith.constant 0 : i32
    %c4_i32_62 = arith.constant 4 : i32
    %c0_i32_63 = arith.constant 0 : i32
    %c0_i32_64 = arith.constant 0 : i32
    %51 = tpu.memref_slice %arg2[%c0_i32_61, %c4_i32_62, %c0_i32_63, %c0_i32_64] : memref<2x10x8x128xf32, #tpu.memory_space<any>> -> memref<2x2x8x128xf32, #tpu.memory_space<any>>
    %52 = tpu.memref_slice %arg13[%c7_i32_60] : memref<10x!tpu.dma_semaphore, #tpu.memory_space<semaphore_mem>> -> memref<1x!tpu.dma_semaphore, #tpu.memory_space<semaphore_mem>>
    %53 = tpu.memref_squeeze %52 : memref<1x!tpu.dma_semaphore, #tpu.memory_space<semaphore_mem>> -> memref<!tpu.dma_semaphore, #tpu.memory_space<semaphore_mem>>
    tpu.wait_dma2 semaphore(%53 : memref<!tpu.dma_semaphore, #tpu.memory_space<semaphore_mem>>) src(%51 : memref<2x2x8x128xf32, #tpu.memory_space<any>>) dst(%arg10 : memref<2x2x8x128xf32, #tpu.memory_space<any>>)
    %c8_i32_65 = arith.constant 8 : i32
    %c0_i32_66 = arith.constant 0 : i32
    %c6_i32_67 = arith.constant 6 : i32
    %c0_i32_68 = arith.constant 0 : i32
    %c0_i32_69 = arith.constant 0 : i32
    %54 = tpu.memref_slice %arg2[%c0_i32_66, %c6_i32_67, %c0_i32_68, %c0_i32_69] : memref<2x10x8x128xf32, #tpu.memory_space<any>> -> memref<2x2x8x128xf32, #tpu.memory_space<any>>
    %55 = tpu.memref_slice %arg13[%c8_i32_65] : memref<10x!tpu.dma_semaphore, #tpu.memory_space<semaphore_mem>> -> memref<1x!tpu.dma_semaphore, #tpu.memory_space<semaphore_mem>>
    %56 = tpu.memref_squeeze %55 : memref<1x!tpu.dma_semaphore, #tpu.memory_space<semaphore_mem>> -> memref<!tpu.dma_semaphore, #tpu.memory_space<semaphore_mem>>
    tpu.wait_dma2 semaphore(%56 : memref<!tpu.dma_semaphore, #tpu.memory_space<semaphore_mem>>) src(%54 : memref<2x2x8x128xf32, #tpu.memory_space<any>>) dst(%arg11 : memref<2x2x8x128xf32, #tpu.memory_space<any>>)
    %c9_i32_70 = arith.constant 9 : i32
    %c0_i32_71 = arith.constant 0 : i32
    %c8_i32_72 = arith.constant 8 : i32
    %c0_i32_73 = arith.constant 0 : i32
    %c0_i32_74 = arith.constant 0 : i32
    %57 = tpu.memref_slice %arg2[%c0_i32_71, %c8_i32_72, %c0_i32_73, %c0_i32_74] : memref<2x10x8x128xf32, #tpu.memory_space<any>> -> memref<2x2x8x128xf32, #tpu.memory_space<any>>
    %58 = tpu.memref_slice %arg13[%c9_i32_70] : memref<10x!tpu.dma_semaphore, #tpu.memory_space<semaphore_mem>> -> memref<1x!tpu.dma_semaphore, #tpu.memory_space<semaphore_mem>>
    %59 = tpu.memref_squeeze %58 : memref<1x!tpu.dma_semaphore, #tpu.memory_space<semaphore_mem>> -> memref<!tpu.dma_semaphore, #tpu.memory_space<semaphore_mem>>
    tpu.wait_dma2 semaphore(%59 : memref<!tpu.dma_semaphore, #tpu.memory_space<semaphore_mem>>) src(%57 : memref<2x2x8x128xf32, #tpu.memory_space<any>>) dst(%arg12 : memref<2x2x8x128xf32, #tpu.memory_space<any>>)
    return
  }
}

</mosaic_0001>

<llo_original>
// kernel: model_forward.1
$region0: #{model_forward.1}
  #allocation0 [shape = 'u32[]', space=smem, size = 0x4, offset = 0x4, fixed_abs, tag = 'smem constant byte address 0x4 - core index']
  #allocation1 [shape = 'u32[144,128]{1,0:T(1,128)}', space=vmem, size = 0x12000, scoped, tag = 'internal scratch']
  #allocation2 [shape = 's32[10]{0}', space=sflag, size = 0x28, scoped, tag = 'scratch operand']
  #allocation3 [shape = 's32[]', space=sflag, size = 0x4, offset = 0, fixed_abs, tag = 'sflag constant byte address 0x0 - dummy sync flag']
  #allocation4 [shape = 'u32[0]{0}', space=smem, size = 0, offset = 0, fixed_abs, tag = 'smem constant byte address 0x0 - null']
  #allocation5 [shape = 's32[]', space=sflag, size = 0x4, offset = 0, fixed_abs, tag = 'sflag constant byte address 0x0 - dummy sync flag']
  #allocation6 [shape = 'u32[0]{0}', space=smem, size = 0, offset = 0, fixed_abs, tag = 'smem constant byte address 0x0 - null']
  #allocation7 [shape = 's32[]', space=sflag, size = 0x4, offset = 0, fixed_abs, tag = 'sflag constant byte address 0x0 - dummy sync flag']
  #allocation9 [shape = 's32[]', space=sflag, size = 0x4, offset = 0, fixed_abs, tag = 'sflag constant byte address 0x0 - dummy sync flag']
  #allocation11 [shape = 's32[]', space=sflag, size = 0x4, offset = 0, fixed_abs, tag = 'sflag constant byte address 0x0 - dummy sync flag']
  #allocation13 [shape = 's32[]', space=sflag, size = 0x4, offset = 0, fixed_abs, tag = 'sflag constant byte address 0x0 - dummy sync flag']
  #allocation15 [shape = 's32[]', space=sflag, size = 0x4, offset = 0, fixed_abs, tag = 'sflag constant byte address 0x0 - dummy sync flag']
  #allocation17 [shape = 's32[]', space=sflag, size = 0x4, offset = 0, fixed_abs, tag = 'sflag constant byte address 0x0 - dummy sync flag']
  #allocation19 [shape = 's32[]', space=sflag, size = 0x4, offset = 0, fixed_abs, tag = 'sflag constant byte address 0x0 - dummy sync flag']
  #allocation21 [shape = 's32[]', space=sflag, size = 0x4, offset = 0, fixed_abs, tag = 'sflag constant byte address 0x0 - dummy sync flag']
  %s0 = inlined_call_operand.hbm [shape: f32[16,128], index: 0, kind: input, shape index: {}]
  %s1 = inlined_call_operand.hbm [shape: f32[2,24,128], index: 1, kind: input, shape index: {}]
  %s2 = inlined_call_operand.hbm [shape: f32[2,10,8,128], index: 2, kind: input, shape index: {}]
  %s3 = inlined_call_operand.hbm [shape: f32[8,128], index: 3, kind: output, shape index: {0}]
  %s4 = inlined_call_operand.hbm [shape: f32[8,128], index: 4, kind: output, shape index: {1}]
  %s5 = inlined_call_operand.hbm [shape: f32[2,8,128], index: 5, kind: output, shape index: {2}]
  %s6 = inlined_call_operand.hbm [shape: f32[2,8,128], index: 6, kind: output, shape index: {3}]
  %s7 = inlined_call_operand.hbm [shape: f32[2,8,128], index: 7, kind: output, shape index: {4}]
  %s8 = inlined_call_operand.hbm [shape: f32[2,2,8,128], index: 8, kind: output, shape index: {5}]
  %s9 = inlined_call_operand.hbm [shape: f32[2,2,8,128], index: 9, kind: output, shape index: {6}]
  %s10 = inlined_call_operand.hbm [shape: f32[2,2,8,128], index: 10, kind: output, shape index: {7}]
  %s11 = inlined_call_operand.hbm [shape: f32[2,2,8,128], index: 11, kind: output, shape index: {8}]
  %s12 = inlined_call_operand.hbm [shape: f32[2,2,8,128], index: 12, kind: output, shape index: {9}]
  %13 = xla_tuple %s3, %s4, %s5, %s6, %s7, %s8, %s9, %s10, %s11, %s12
  %s14 = sld [smem:[#allocation0]]
  $region2: #{model_forward.1} parent=0
    _
  %s16 = ssub.s32 1, %s14
  %s17 = scalar_select 0, %s16, %s14
  $region1: #{model_forward.1} parent=0
    #allocation8 [shape = 'u32[3]{0}', space=smem, size = 0xc, scoped, tag = 'DMA stride descriptor']
    #allocation10 [shape = 'u32[3]{0}', space=smem, size = 0xc, scoped, tag = 'DMA stride descriptor']
    #allocation12 [shape = 'u32[3]{0}', space=smem, size = 0xc, scoped, tag = 'DMA stride descriptor']
    #allocation14 [shape = 'u32[3]{0}', space=smem, size = 0xc, scoped, tag = 'DMA stride descriptor']
    #allocation16 [shape = 'u32[3]{0}', space=smem, size = 0xc, scoped, tag = 'DMA stride descriptor']
    #allocation18 [shape = 'u32[3]{0}', space=smem, size = 0xc, scoped, tag = 'DMA stride descriptor']
    #allocation20 [shape = 'u32[3]{0}', space=smem, size = 0xc, scoped, tag = 'DMA stride descriptor']
    #allocation22 [shape = 'u32[3]{0}', space=smem, size = 0xc, scoped, tag = 'DMA stride descriptor']
    %s19 = sshll.u32 1, 14
    %s20 = sxor.u32 4294967295, %s19
    %s23 = sshll.u32 3, 24
    %s24 = sxor.u32 4294967295, %s23
    %s25 = sand.u32 0, %s24
    %s27 = sor.u32 %s25, 0
    %30 = dma.general %s0, 128, %s3, [#allocation2], [#allocation3], [#allocation4], %s27, 0
    %s31 = scalar_lea.hbm %s0, 128
    %s32 = scalar_lea.sflag [#allocation2], 1
    %s34 = sshll.u32 1, 14
    %s35 = sxor.u32 4294967295, %s34
    %s38 = sshll.u32 3, 24
    %s39 = sxor.u32 4294967295, %s38
    %s40 = sand.u32 0, %s39
    %s42 = sor.u32 %s40, 0
    %45 = dma.general %s31, 128, %s4, %s32, [#allocation5], [#allocation6], %s42, 0
    %s46 = scalar_lea.sflag [#allocation2], 2
    %s48 = sshll.u32 1, 14
    %s49 = sxor.u32 4294967295, %s48
    %s52 = sshll.u32 3, 24
    %s53 = sxor.u32 4294967295, %s52
    %s54 = sand.u32 0, %s53
    %s56 = sor.u32 %s54, 0
    %59 = sst [smem:[#allocation8]] 384
    %s60 = scalar_lea.smem [#allocation8], 1
    %61 = sst [smem:[%s60]] 128
    %s62 = scalar_lea.smem [#allocation8], 2
    %63 = sst [smem:[%s62]] 8
    %65 = dma.general %s1, 256, %s5, %s46, [#allocation7], [#allocation8], %s56, 0
    %s66 = scalar_lea.hbm %s1, 128
    %s67 = scalar_lea.sflag [#allocation2], 3
    %s69 = sshll.u32 1, 14
    %s70 = sxor.u32 4294967295, %s69
    %s73 = sshll.u32 3, 24
    %s74 = sxor.u32 4294967295, %s73
    %s75 = sand.u32 0, %s74
    %s77 = sor.u32 %s75, 0
    %80 = sst [smem:[#allocation10]] 384
    %s81 = scalar_lea.smem [#allocation10], 1
    %82 = sst [smem:[%s81]] 128
    %s83 = scalar_lea.smem [#allocation10], 2
    %84 = sst [smem:[%s83]] 8
    %86 = dma.general %s66, 256, %s6, %s67, [#allocation9], [#allocation10], %s77, 0
    %s87 = scalar_lea.hbm %s1, 256
    %s88 = scalar_lea.sflag [#allocation2], 4
    %s90 = sshll.u32 1, 14
    %s91 = sxor.u32 4294967295, %s90
    %s94 = sshll.u32 3, 24
    %s95 = sxor.u32 4294967295, %s94
    %s96 = sand.u32 0, %s95
    %s98 = sor.u32 %s96, 0
    %101 = sst [smem:[#allocation12]] 384
    %s102 = scalar_lea.smem [#allocation12], 1
    %103 = sst [smem:[%s102]] 128
    %s104 = scalar_lea.smem [#allocation12], 2
    %105 = sst [smem:[%s104]] 8
    %107 = dma.general %s87, 256, %s7, %s88, [#allocation11], [#allocation12], %s98, 0
    %s108 = scalar_lea.sflag [#allocation2], 5
    %s110 = sshll.u32 1, 14
    %s111 = sxor.u32 4294967295, %s110
    %s114 = sshll.u32 3, 24
    %s115 = sxor.u32 4294967295, %s114
    %s116 = sand.u32 0, %s115
    %s118 = sor.u32 %s116, 0
    %121 = sst [smem:[#allocation14]] 1280
    %s122 = scalar_lea.smem [#allocation14], 1
    %123 = sst [smem:[%s122]] 256
    %s124 = scalar_lea.smem [#allocation14], 2
    %125 = sst [smem:[%s124]] 16
    %127 = dma.general %s2, 512, %s8, %s108, [#allocation13], [#allocation14], %s118, 0
    %s128 = scalar_lea.hbm %s2, 256
    %s129 = scalar_lea.sflag [#allocation2], 6
    %s131 = sshll.u32 1, 14
    %s132 = sxor.u32 4294967295, %s131
    %s135 = sshll.u32 3, 24
    %s136 = sxor.u32 4294967295, %s135
    %s137 = sand.u32 0, %s136
    %s139 = sor.u32 %s137, 0
    %142 = sst [smem:[#allocation16]] 1280
    %s143 = scalar_lea.smem [#allocation16], 1
    %144 = sst [smem:[%s143]] 256
    %s145 = scalar_lea.smem [#allocation16], 2
    %146 = sst [smem:[%s145]] 16
    %148 = dma.general %s128, 512, %s9, %s129, [#allocation15], [#allocation16], %s139, 0
    %s149 = scalar_lea.hbm %s2, 512
    %s150 = scalar_lea.sflag [#allocation2], 7
    %s152 = sshll.u32 1, 14
    %s153 = sxor.u32 4294967295, %s152
    %s156 = sshll.u32 3, 24
    %s157 = sxor.u32 4294967295, %s156
    %s158 = sand.u32 0, %s157
    %s160 = sor.u32 %s158, 0
    %163 = sst [smem:[#allocation18]] 1280
    %s164 = scalar_lea.smem [#allocation18], 1
    %165 = sst [smem:[%s164]] 256
    %s166 = scalar_lea.smem [#allocation18], 2
    %167 = sst [smem:[%s166]] 16
    %169 = dma.general %s149, 512, %s10, %s150, [#allocation17], [#allocation18], %s160, 0
    %s170 = scalar_lea.hbm %s2, 768
    %s171 = scalar_lea.sflag [#allocation2], 8
    %s173 = sshll.u32 1, 14
    %s174 = sxor.u32 4294967295, %s173
    %s177 = sshll.u32 3, 24
    %s178 = sxor.u32 4294967295, %s177
    %s179 = sand.u32 0, %s178
    %s181 = sor.u32 %s179, 0
    %184 = sst [smem:[#allocation20]] 1280
    %s185 = scalar_lea.smem [#allocation20], 1
    %186 = sst [smem:[%s185]] 256
    %s187 = scalar_lea.smem [#allocation20], 2
    %188 = sst [smem:[%s187]] 16
    %190 = dma.general %s170, 512, %s11, %s171, [#allocation19], [#allocation20], %s181, 0
    %s191 = scalar_lea.hbm %s2, 1024
    %s192 = scalar_lea.sflag [#allocation2], 9
    %s194 = sshll.u32 1, 14
    %s195 = sxor.u32 4294967295, %s194
    %s198 = sshll.u32 3, 24
    %s199 = sxor.u32 4294967295, %s198
    %s200 = sand.u32 0, %s199
    %s202 = sor.u32 %s200, 0
    %205 = sst [smem:[#allocation22]] 1280
    %s206 = scalar_lea.smem [#allocation22], 1
    %207 = sst [smem:[%s206]] 256
    %s208 = scalar_lea.smem [#allocation22], 2
    %209 = sst [smem:[%s208]] 16
    %211 = dma.general %s191, 512, %s12, %s192, [#allocation21], [#allocation22], %s202, 0
    %s212 = smul.u32 8, 1
    %s213 = sshll.u32 %s212, 4
    %214 = dma.done [#allocation2], %s213
    %s215 = sshll.u32 %s212, 4
    %216 = dma.done %s32, %s215
    %s217 = smul.u32 2, 8
    %s218 = smul.u32 %s217, 1
    %s219 = sshll.u32 %s218, 4
    %220 = dma.done %s46, %s219
    %s221 = sshll.u32 %s218, 4
    %222 = dma.done %s67, %s221
    %s223 = sshll.u32 %s218, 4
    %224 = dma.done %s88, %s223
    %s225 = smul.u32 2, 2
    %s226 = smul.u32 %s225, 8
    %s227 = smul.u32 %s226, 1
    %s228 = sshll.u32 %s227, 4
    %229 = dma.done %s108, %s228
    %s230 = sshll.u32 %s227, 4
    %231 = dma.done %s129, %s230
    %s232 = sshll.u32 %s227, 4
    %233 = dma.done %s150, %s232
    %s234 = sshll.u32 %s227, 4
    %235 = dma.done %s171, %s234
    %s236 = sshll.u32 %s227, 4
    %237 = dma.done %s192, %s236
  %238 = vsyncmov [#allocation2]
  %s239 = vpop.sfrf %238
  %p240 = scmp.eq.s32.totalorder %s239, 0
  %p241 = pneg %p240
  %243 = shalt.err (%p241)
  %s244 = scalar_lea.sflag [#allocation2], 1
  %245 = vsyncmov %s244
  %s246 = vpop.sfrf %245
  %p247 = scmp.eq.s32.totalorder %s246, 0
  %p248 = pneg %p247
  %250 = shalt.err (%p248)
  %s251 = scalar_lea.sflag [#allocation2], 2
  %252 = vsyncmov %s251
  %s253 = vpop.sfrf %252
  %p254 = scmp.eq.s32.totalorder %s253, 0
  %p255 = pneg %p254
  %257 = shalt.err (%p255)
  %s258 = scalar_lea.sflag [#allocation2], 3
  %259 = vsyncmov %s258
  %s260 = vpop.sfrf %259
  %p261 = scmp.eq.s32.totalorder %s260, 0
  %p262 = pneg %p261
  %264 = shalt.err (%p262)
  %s265 = scalar_lea.sflag [#allocation2], 4
  %266 = vsyncmov %s265
  %s267 = vpop.sfrf %266
  %p268 = scmp.eq.s32.totalorder %s267, 0
  %p269 = pneg %p268
  %271 = shalt.err (%p269)
  %s272 = scalar_lea.sflag [#allocation2], 5
  %273 = vsyncmov %s272
  %s274 = vpop.sfrf %273
  %p275 = scmp.eq.s32.totalorder %s274, 0
  %p276 = pneg %p275
  %278 = shalt.err (%p276)
  %s279 = scalar_lea.sflag [#allocation2], 6
  %280 = vsyncmov %s279
  %s281 = vpop.sfrf %280
  %p282 = scmp.eq.s32.totalorder %s281, 0
  %p283 = pneg %p282
  %285 = shalt.err (%p283)
  %s286 = scalar_lea.sflag [#allocation2], 7
  %287 = vsyncmov %s286
  %s288 = vpop.sfrf %287
  %p289 = scmp.eq.s32.totalorder %s288, 0
  %p290 = pneg %p289
  %292 = shalt.err (%p290)
  %s293 = scalar_lea.sflag [#allocation2], 8
  %294 = vsyncmov %s293
  %s295 = vpop.sfrf %294
  %p296 = scmp.eq.s32.totalorder %s295, 0
  %p297 = pneg %p296
  %299 = shalt.err (%p297)
  %s300 = scalar_lea.sflag [#allocation2], 9
  %301 = vsyncmov %s300
  %s302 = vpop.sfrf %301
  %p303 = scmp.eq.s32.totalorder %s302, 0
  %p304 = pneg %p303
  %306 = shalt.err (%p304)

</llo_original>
